<compile_context>
chip_gen: v6e
topology: v6e:2x2x1
jax: 0.10.0
libtpu: 0.0.40
codegen_flags: <defaults>
</compile_context>

<pallas_src>
import functools

import jax
import jax.numpy as jnp
from jax.experimental import pallas as pl
from jax.experimental.pallas import tpu as pltpu


# ------------------------------ fused Pallas kernel ------------------------------


def _pearl_fused_kernel(
    # inputs
    ctx_ref, obs_ref, eps_ref, wslab_ref, fslab_ref,
    # outputs
    pol_ref, lat_ref,
    # static config (bound via functools.partial)
    *, T, N, B, L, A, woffs, foffs,
):
    f32 = jnp.float32
    bf16 = jnp.bfloat16

    def wseg(name):
        o, r, c = woffs[name]
        return wslab_ref[o:o + r, 0:c]          # static slice of the bf16 weight slab

    def fseg(name):
        o, r, c = foffs[name]
        return fslab_ref[o:o + r, 0:c]          # static slice of the f32 slab

    def bdot(x, w):
        # bf16 MXU inputs, f32 accumulation.
        return jnp.dot(x.astype(bf16), w, preferred_element_type=f32)

    # ---- context encoder: 3-layer MLP with ReLU; merged mu|pre_sigma output head ----
    ctx = ctx_ref[...]                                            # (T*N, C) f32
    h1 = jnp.maximum(bdot(ctx, wseg("we1")) + fseg("be1"), 0.0)
    h2 = jnp.maximum(bdot(h1, wseg("we2")) + fseg("be2"), 0.0)
    # head kept in f32 (precision=HIGHEST): 1/softplus(pre) near the 1e-7 clamp is
    # sensitive to bf16 truncation (review correctness concern).
    params = jnp.dot(h2, fseg("we3"), preferred_element_type=f32,
                     precision=jax.lax.Precision.HIGHEST) + fseg("be3")   # (T*N, 2L)
    mu = params[:, :L]
    pre = params[:, L:]

    # softplus matching F.softplus (beta=1, threshold=20), then clamp(min=1e-7)
    sp = jnp.where(pre > 20.0, pre, jnp.log1p(jnp.exp(jnp.minimum(pre, 20.0))))
    sigma2 = jnp.maximum(sp, 1e-7)
    inv = 1.0 / sigma2                                            # (T*N, L)

    # ---- product of Gaussians over the N context points per task ----
    # f32 sublane reduce (XLU) — no MXU pass, guaranteed f32 accumulation.
    # The (T*N, L) -> (T, N, L) split is tile-aligned (N = 8 sublanes).
    sum_inv = jnp.sum(inv.reshape(T, N, L), axis=1)               # (T, L)
    sum_mu_inv = jnp.sum((mu * inv).reshape(T, N, L), axis=1)     # (T, L)
    z_var = 1.0 / sum_inv
    z_mean = z_var * sum_mu_inv
    task_z = z_mean + jnp.sqrt(z_var) * eps_ref[...]              # rsample

    # merged latent output: [task_z | z_mean | z_var], one store
    lat_ref[...] = jnp.concatenate([task_z, z_mean, z_var], axis=1)

    # ---- policy MLP; torch's cat([obs, task_z.detach().repeat(b,1)], 1) folded into the
    # ---- first layer (W1 split into obs|z blocks). detach() is backprop-only; forward here.
    zproj = bdot(task_z, wseg("wp1z"))                            # (T, H)
    H = zproj.shape[1]
    # task-major repeat over B rows via sublane broadcast + concat (no matmul, no unaligned
    # reshape); unrolled over the (small) task count T.
    zrep = jnp.concatenate(
        [jnp.broadcast_to(zproj[t:t + 1, :], (B, H)) for t in range(T)], axis=0)  # (T*B, H)
    obs = obs_ref[...]                                            # (T*B, O)
    p1 = jnp.maximum(bdot(obs, wseg("wp1o")) + zrep + fseg("bp1"), 0.0)
    p2 = jnp.maximum(bdot(p1, wseg("wp2")) + fseg("bp2"), 0.0)

    # merged output head: [mean | log_std] in one MXU dispatch, then clip/exp epilogue (f32)
    head = bdot(p2, wseg("wp3")) + fseg("bp3")                    # (T*B, 2A)
    mean = head[:, :A]
    log_std = jnp.clip(head[:, A:], -20.0, 2.0)
    pol_ref[...] = jnp.concatenate([mean, jnp.exp(log_std)], axis=1)   # [mean | std]


# ------------------------------ parameter setup ------------------------------


def _init_linear(key, fan_in, fan_out):
    kw, kb = jax.random.split(key)
    scale = 1.0 / jnp.sqrt(jnp.float32(fan_in))
    w = jax.random.uniform(kw, (fan_in, fan_out), jnp.float32, -scale, scale)
    b = jax.random.uniform(kb, (1, fan_out), jnp.float32, -scale, scale)
    return w, b


def init_mlp3(key, dims):
    """dims = (in, h1, h2, out) -> (w1, b1, w2, b2, w3, b3) in float32."""
    k1, k2, k3 = jax.random.split(key, 3)
    w1, b1 = _init_linear(k1, dims[0], dims[1])
    w2, b2 = _init_linear(k2, dims[1], dims[2])
    w3, b3 = _init_linear(k3, dims[2], dims[3])
    return (w1, b1, w2, b2, w3, b3)


def _pack_slab(segments, row_align, dtype):
    """Row-stack 2D arrays into one slab with tile-aligned row offsets.

    segments: list of (name, 2D array).  Returns (slab, {name: (row_off, rows, cols)}).
    """
    width = max(a.shape[1] for _, a in segments)
    offs = {}
    row = 0
    for name, a in segments:
        r, c = a.shape
        offs[name] = (row, r, c)
        row += ((r + row_align - 1) // row_align) * row_align
    slab = jnp.zeros((row, width), dtype)
    for name, a in segments:
        o, r, c = offs[name]
        slab = slab.at[o:o + r, 0:c].set(a.astype(dtype))
    return slab, offs


def prepare_pearl_params(enc_params, pol_params, obs_dim):
    """One-time (outside jit) packing of all MLP params into 2 kernel-ready slabs.

    - bf16 weight slab: MXU operands (encoder L1/L2, policy obs-block/z-block/L2/merged head),
      segment offsets aligned to 16 rows.
    - f32 slab: encoder output head (kept f32 for PoG precision) + every bias,
      segment offsets aligned to 8 rows.
    """
    we1, be1, we2, be2, we3, be3 = enc_params
    wp1, bp1, wp2, bp2, wp3, bp3 = pol_params
    wp1_o, wp1_z = wp1[:obs_dim, :], wp1[obs_dim:, :]   # fold the obs|z concat into W1

    wslab, woffs = _pack_slab(
        [("we1", we1), ("we2", we2), ("wp1o", wp1_o), ("wp1z", wp1_z),
         ("wp2", wp2), ("wp3", wp3)],
        row_align=16, dtype=jnp.bfloat16)
    fslab, foffs = _pack_slab(
        [("we3", we3), ("be1", be1), ("be2", be2), ("be3", be3),
         ("bp1", bp1), ("bp2", bp2), ("bp3", bp3)],
        row_align=8, dtype=jnp.float32)
    return wslab, fslab, woffs, foffs


# ------------------------------ PEARLAgent forward ------------------------------


def pearl_agent_forward(obs, context, eps, wslab, fslab,
                        *, woffs, foffs, latent_dim, action_dim):
    """JAX/Pallas version of PEARLAgent.forward(obs, context, return_task_z=True).

    obs:     (T, B, Odim) f32
    context: (T, N, Cdim) f32
    eps:     (T, latent_dim) f32 rsample noise
    Returns (action_mean, action_std, task_z, z_means, z_vars).
    """
    T, N, Cdim = context.shape
    _, B, Odim = obs.shape

    ctx_flat = context.reshape(T * N, Cdim)
    obs_flat = obs.reshape(T * B, Odim)

    kernel = functools.partial(
        _pearl_fused_kernel, T=T, N=N, B=B, L=latent_dim, A=action_dim,
        woffs=woffs, foffs=foffs)

    vmem = pl.BlockSpec(memory_space=pltpu.MemorySpace.VMEM)
    pol_out, lat_out = pl.pallas_call(
        kernel,
        out_shape=(
            jax.ShapeDtypeStruct((T * B, 2 * action_dim), jnp.float32),  # [mean | std]
            jax.ShapeDtypeStruct((T, 3 * latent_dim), jnp.float32),      # [z | z_mean | z_var]
        ),
        in_specs=[vmem] * 5,
        out_specs=(vmem, vmem),
    )(ctx_flat, obs_flat, eps, wslab, fslab)

    # Cheap XLA slices of the two merged outputs.
    action_mean = pol_out[:, :action_dim]
    action_std = pol_out[:, action_dim:]
    task_z = lat_out[:, :latent_dim]
    z_means = lat_out[:, latent_dim:2 * latent_dim]
    z_vars = lat_out[:, 2 * latent_dim:]

    # TODO(synk): the torch policy returns a TanhNormal distribution object; we return its
    # (mean, std) parameters, which fully determine it.
    return action_mean, action_std, task_z, z_means, z_vars


# -------------------------------------- main --------------------------------------


if __name__ == "__main__":
    # Small shapes consistent with the module's forward.
    T = 2            # number of tasks
    N = 8            # context transitions per task
    B = 4            # observations per task
    OBS_DIM = 11
    ACT_DIM = 4
    CTX_DIM = OBS_DIM + ACT_DIM + 1        # (o, a, r); use_next_obs_in_context=False
    LATENT_DIM = 8
    HIDDEN = 32

    key = jax.random.PRNGKey(0)
    k_ctx, k_obs, k_eps, k_enc, k_pol = jax.random.split(key, 5)

    context = jax.random.normal(k_ctx, (T, N, CTX_DIM), jnp.float32)
    obs = jax.random.normal(k_obs, (T, B, OBS_DIM), jnp.float32)
    eps = jax.random.normal(k_eps, (T, LATENT_DIM), jnp.float32)   # rsample noise

    # context encoder: CTX_DIM -> HIDDEN -> HIDDEN -> 2*LATENT_DIM
    enc_params = init_mlp3(k_enc, (CTX_DIM, HIDDEN, HIDDEN, 2 * LATENT_DIM))
    # policy: (OBS_DIM + LATENT_DIM) -> HIDDEN -> HIDDEN -> 2*ACT_DIM (mean | log_std)
    pol_params = init_mlp3(k_pol, (OBS_DIM + LATENT_DIM, HIDDEN, HIDDEN, 2 * ACT_DIM))

    # One-time packing into 2 slabs (kept outside the jitted forward).
    wslab, fslab, woffs, foffs = prepare_pearl_params(enc_params, pol_params, OBS_DIM)

    fwd = jax.jit(functools.partial(
        pearl_agent_forward, woffs=woffs, foffs=foffs,
        latent_dim=LATENT_DIM, action_dim=ACT_DIM))

    outs = fwd(obs, context, eps, wslab, fslab)
    jax.block_until_ready(outs)
    action_mean, action_std, task_z, z_means, z_vars = outs

    assert action_mean.shape == (T * B, ACT_DIM)
    assert action_std.shape == (T * B, ACT_DIM)
    assert task_z.shape == (T, LATENT_DIM)
    assert z_means.shape == (T, LATENT_DIM)
    assert z_vars.shape == (T, LATENT_DIM)
    assert bool(jnp.all(jnp.isfinite(action_mean)))
    assert bool(jnp.all(jnp.isfinite(action_std)))
    assert bool(jnp.all(action_std > 0.0))
    assert bool(jnp.all(z_vars > 0.0))

    print("KERNEL_OK")
</pallas_src>

<mosaic_0001>
module attributes {stable_mosaic.version = 11 : i64} {
  func.func @_pearl_fused_kernel(%arg0: memref<16x16xf32, #tpu.memory_space<vmem>>, %arg1: memref<8x11xf32, #tpu.memory_space<vmem>>, %arg2: memref<2x8xf32, #tpu.memory_space<vmem>>, %arg3: memref<144x32xbf16, #tpu.memory_space<vmem>>, %arg4: memref<80x32xf32, #tpu.memory_space<vmem>>, %arg5: memref<8x8xf32, #tpu.memory_space<vmem>>, %arg6: memref<2x24xf32, #tpu.memory_space<vmem>>) attributes {dimension_semantics = [], scalar_prefetch = 0 : i64, scratch_operands = 0 : i64, tpu.core_type = #tpu.core_type<tc>} {
    %c0 = arith.constant 0 : index
    %c0_0 = arith.constant 0 : index
    %0 = vector.load %arg0[%c0, %c0_0] : memref<16x16xf32, #tpu.memory_space<vmem>>, vector<16x16xf32>
    %c0_1 = arith.constant 0 : index
    %c0_2 = arith.constant 0 : index
    %1 = vector.load %arg3[%c0_1, %c0_2] : memref<144x32xbf16, #tpu.memory_space<vmem>>, vector<16x32xbf16>
    %2 = arith.truncf %0 : vector<16x16xf32> to vector<16x16xbf16>
    %cst = arith.constant dense<0.000000e+00> : vector<16x32xf32>
    %3 = tpu.matmul %2, %1, %cst {dimension_numbers = #tpu.dot_dimension_numbers<[1], [0], [0], [1], [0, 0, 1, 1], [], []>} : vector<16x16xbf16>, vector<16x32xbf16>, vector<16x32xf32> -> vector<16x32xf32>
    %c32 = arith.constant 32 : index
    %c0_3 = arith.constant 0 : index
    %4 = vector.load %arg4[%c32, %c0_3] : memref<80x32xf32, #tpu.memory_space<vmem>>, vector<1x32xf32>
    %5 = vector.broadcast %4 : vector<1x32xf32> to vector<16x32xf32>
    %6 = arith.addf %3, %5 : vector<16x32xf32>
    %cst_4 = arith.constant 0.000000e+00 : f32
    %7 = vector.broadcast %cst_4 : f32 to vector<16x32xf32>
    %8 = arith.maximumf %6, %7 : vector<16x32xf32>
    %c16 = arith.constant 16 : index
    %c0_5 = arith.constant 0 : index
    %9 = vector.load %arg3[%c16, %c0_5] : memref<144x32xbf16, #tpu.memory_space<vmem>>, vector<32x32xbf16>
    %10 = arith.truncf %8 : vector<16x32xf32> to vector<16x32xbf16>
    %cst_6 = arith.constant dense<0.000000e+00> : vector<16x32xf32>
    %11 = tpu.matmul %10, %9, %cst_6 {dimension_numbers = #tpu.dot_dimension_numbers<[1], [0], [0], [1], [0, 0, 1, 1], [], []>} : vector<16x32xbf16>, vector<32x32xbf16>, vector<16x32xf32> -> vector<16x32xf32>
    %c40 = arith.constant 40 : index
    %c0_7 = arith.constant 0 : index
    %12 = vector.load %arg4[%c40, %c0_7] : memref<80x32xf32, #tpu.memory_space<vmem>>, vector<1x32xf32>
    %13 = vector.broadcast %12 : vector<1x32xf32> to vector<16x32xf32>
    %14 = arith.addf %11, %13 : vector<16x32xf32>
    %cst_8 = arith.constant 0.000000e+00 : f32
    %15 = vector.broadcast %cst_8 : f32 to vector<16x32xf32>
    %16 = arith.maximumf %14, %15 : vector<16x32xf32>
    %c0_9 = arith.constant 0 : index
    %c0_10 = arith.constant 0 : index
    %17 = vector.load %arg4[%c0_9, %c0_10] : memref<80x32xf32, #tpu.memory_space<vmem>>, vector<32x16xf32>
    %cst_11 = arith.constant dense<0.000000e+00> : vector<16x16xf32>
    %18 = tpu.matmul %16, %17, %cst_11 {dimension_numbers = #tpu.dot_dimension_numbers<[1], [0], [0], [1], [0, 0, 1, 1], [], []>, precision = #tpu.contract_precision<fp32>} : vector<16x32xf32>, vector<32x16xf32>, vector<16x16xf32> -> vector<16x16xf32>
    %c48 = arith.constant 48 : index
    %c0_12 = arith.constant 0 : index
    %19 = vector.load %arg4[%c48, %c0_12] : memref<80x32xf32, #tpu.memory_space<vmem>>, vector<1x16xf32>
    %20 = vector.broadcast %19 : vector<1x16xf32> to vector<16x16xf32>
    %21 = arith.addf %18, %20 : vector<16x16xf32>
    %22 = vector.extract_strided_slice %21 {offsets = [0, 0], sizes = [16, 8], strides = [1, 1]} : vector<16x16xf32> to vector<16x8xf32>
    %23 = vector.extract_strided_slice %21 {offsets = [0, 8], sizes = [16, 8], strides = [1, 1]} : vector<16x16xf32> to vector<16x8xf32>
    %cst_13 = arith.constant 2.000000e+01 : f32
    %24 = vector.broadcast %cst_13 : f32 to vector<16x8xf32>
    %25 = arith.cmpf ogt, %23, %24 : vector<16x8xf32>
    %cst_14 = arith.constant 2.000000e+01 : f32
    %26 = vector.broadcast %cst_14 : f32 to vector<16x8xf32>
    %27 = arith.minimumf %23, %26 : vector<16x8xf32>
    %28 = math.exp %27 : vector<16x8xf32>
    %29 = math.log1p %28 : vector<16x8xf32>
    %30 = arith.select %25, %23, %29 : vector<16x8xi1>, vector<16x8xf32>
    %cst_15 = arith.constant 1.000000e-07 : f32
    %31 = vector.broadcast %cst_15 : f32 to vector<16x8xf32>
    %32 = arith.maximumf %30, %31 : vector<16x8xf32>
    %cst_16 = arith.constant 1.000000e+00 : f32
    %33 = vector.broadcast %cst_16 : f32 to vector<16x8xf32>
    %34 = arith.divf %33, %32 : vector<16x8xf32>
    %35 = vector.shape_cast %34 : vector<16x8xf32> to vector<2x8x8xf32>
    %cst_17 = arith.constant dense<0.000000e+00> : vector<2x8xf32>
    %36 = vector.multi_reduction <add>, %35, %cst_17 [1] : vector<2x8x8xf32> to vector<2x8xf32>
    %37 = arith.mulf %22, %34 : vector<16x8xf32>
    %38 = vector.shape_cast %37 : vector<16x8xf32> to vector<2x8x8xf32>
    %cst_18 = arith.constant dense<0.000000e+00> : vector<2x8xf32>
    %39 = vector.multi_reduction <add>, %38, %cst_18 [1] : vector<2x8x8xf32> to vector<2x8xf32>
    %cst_19 = arith.constant 1.000000e+00 : f32
    %40 = vector.broadcast %cst_19 : f32 to vector<2x8xf32>
    %41 = arith.divf %40, %36 : vector<2x8xf32>
    %42 = arith.mulf %41, %39 : vector<2x8xf32>
    %43 = math.sqrt %41 : vector<2x8xf32>
    %c0_20 = arith.constant 0 : index
    %c0_21 = arith.constant 0 : index
    %44 = vector.load %arg2[%c0_20, %c0_21] : memref<2x8xf32, #tpu.memory_space<vmem>>, vector<2x8xf32>
    %45 = arith.mulf %43, %44 : vector<2x8xf32>
    %46 = arith.addf %42, %45 : vector<2x8xf32>
    %47 = tpu.concatenate %46, %42, %41 in 1 : vector<2x8xf32>, vector<2x8xf32>, vector<2x8xf32> -> vector<2x24xf32>
    %c0_22 = arith.constant 0 : index
    %c0_23 = arith.constant 0 : index
    %48 = vector.load %arg6[%c0_22, %c0_23] : memref<2x24xf32, #tpu.memory_space<vmem>>, vector<2x24xf32>
    tpu.vector_store %arg6[%c0_22, %c0_23], %47 {strides = array<i32>} : memref<2x24xf32, #tpu.memory_space<vmem>>, vector<2x24xf32>,
    %c64 = arith.constant 64 : index
    %c0_24 = arith.constant 0 : index
    %49 = vector.load %arg3[%c64, %c0_24] : memref<144x32xbf16, #tpu.memory_space<vmem>>, vector<8x32xbf16>
    %50 = arith.truncf %46 : vector<2x8xf32> to vector<2x8xbf16>
    %cst_25 = arith.constant dense<0.000000e+00> : vector<2x32xf32>
    %51 = tpu.matmul %50, %49, %cst_25 {dimension_numbers = #tpu.dot_dimension_numbers<[1], [0], [0], [1], [0, 0, 1, 1], [], []>} : vector<2x8xbf16>, vector<8x32xbf16>, vector<2x32xf32> -> vector<2x32xf32>
    %52 = vector.extract_strided_slice %51 {offsets = [0, 0], sizes = [1, 32], strides = [1, 1]} : vector<2x32xf32> to vector<1x32xf32>
    %53 = vector.shape_cast %52 : vector<1x32xf32> to vector<1x32xf32>
    %54 = vector.broadcast %53 : vector<1x32xf32> to vector<4x32xf32>
    %55 = vector.extract_strided_slice %51 {offsets = [1, 0], sizes = [1, 32], strides = [1, 1]} : vector<2x32xf32> to vector<1x32xf32>
    %56 = vector.shape_cast %55 : vector<1x32xf32> to vector<1x32xf32>
    %57 = vector.broadcast %56 : vector<1x32xf32> to vector<4x32xf32>
    %58 = tpu.concatenate %54, %57 in 0 : vector<4x32xf32>, vector<4x32xf32> -> vector<8x32xf32>
    %c0_26 = arith.constant 0 : index
    %c0_27 = arith.constant 0 : index
    %59 = vector.load %arg1[%c0_26, %c0_27] : memref<8x11xf32, #tpu.memory_space<vmem>>, vector<8x11xf32>
    %c48_28 = arith.constant 48 : index
    %c0_29 = arith.constant 0 : index
    %60 = vector.load %arg3[%c48_28, %c0_29] : memref<144x32xbf16, #tpu.memory_space<vmem>>, vector<11x32xbf16>
    %61 = arith.truncf %59 : vector<8x11xf32> to vector<8x11xbf16>
    %cst_30 = arith.constant dense<0.000000e+00> : vector<8x32xf32>
    %62 = tpu.matmul %61, %60, %cst_30 {dimension_numbers = #tpu.dot_dimension_numbers<[1], [0], [0], [1], [0, 0, 1, 1], [], []>} : vector<8x11xbf16>, vector<11x32xbf16>, vector<8x32xf32> -> vector<8x32xf32>
    %63 = arith.addf %62, %58 : vector<8x32xf32>
    %c56 = arith.constant 56 : index
    %c0_31 = arith.constant 0 : index
    %64 = vector.load %arg4[%c56, %c0_31] : memref<80x32xf32, #tpu.memory_space<vmem>>, vector<1x32xf32>
    %65 = vector.broadcast %64 : vector<1x32xf32> to vector<8x32xf32>
    %66 = arith.addf %63, %65 : vector<8x32xf32>
    %cst_32 = arith.constant 0.000000e+00 : f32
    %67 = vector.broadcast %cst_32 : f32 to vector<8x32xf32>
    %68 = arith.maximumf %66, %67 : vector<8x32xf32>
    %c80 = arith.constant 80 : index
    %c0_33 = arith.constant 0 : index
    %69 = vector.load %arg3[%c80, %c0_33] : memref<144x32xbf16, #tpu.memory_space<vmem>>, vector<32x32xbf16>
    %70 = arith.truncf %68 : vector<8x32xf32> to vector<8x32xbf16>
    %cst_34 = arith.constant dense<0.000000e+00> : vector<8x32xf32>
    %71 = tpu.matmul %70, %69, %cst_34 {dimension_numbers = #tpu.dot_dimension_numbers<[1], [0], [0], [1], [0, 0, 1, 1], [], []>} : vector<8x32xbf16>, vector<32x32xbf16>, vector<8x32xf32> -> vector<8x32xf32>
    %c64_35 = arith.constant 64 : index
    %c0_36 = arith.constant 0 : index
    %72 = vector.load %arg4[%c64_35, %c0_36] : memref<80x32xf32, #tpu.memory_space<vmem>>, vector<1x32xf32>
    %73 = vector.broadcast %72 : vector<1x32xf32> to vector<8x32xf32>
    %74 = arith.addf %71, %73 : vector<8x32xf32>
    %cst_37 = arith.constant 0.000000e+00 : f32
    %75 = vector.broadcast %cst_37 : f32 to vector<8x32xf32>
    %76 = arith.maximumf %74, %75 : vector<8x32xf32>
    %c112 = arith.constant 112 : index
    %c0_38 = arith.constant 0 : index
    %77 = vector.load %arg3[%c112, %c0_38] : memref<144x32xbf16, #tpu.memory_space<vmem>>, vector<32x8xbf16>
    %78 = arith.truncf %76 : vector<8x32xf32> to vector<8x32xbf16>
    %cst_39 = arith.constant dense<0.000000e+00> : vector<8x8xf32>
    %79 = tpu.matmul %78, %77, %cst_39 {dimension_numbers = #tpu.dot_dimension_numbers<[1], [0], [0], [1], [0, 0, 1, 1], [], []>} : vector<8x32xbf16>, vector<32x8xbf16>, vector<8x8xf32> -> vector<8x8xf32>
    %c72 = arith.constant 72 : index
    %c0_40 = arith.constant 0 : index
    %80 = vector.load %arg4[%c72, %c0_40] : memref<80x32xf32, #tpu.memory_space<vmem>>, vector<1x8xf32>
    %81 = vector.broadcast %80 : vector<1x8xf32> to vector<8x8xf32>
    %82 = arith.addf %79, %81 : vector<8x8xf32>
    %83 = vector.extract_strided_slice %82 {offsets = [0, 0], sizes = [8, 4], strides = [1, 1]} : vector<8x8xf32> to vector<8x4xf32>
    %84 = vector.extract_strided_slice %82 {offsets = [0, 4], sizes = [8, 4], strides = [1, 1]} : vector<8x8xf32> to vector<8x4xf32>
    %cst_41 = arith.constant -2.000000e+01 : f32
    %cst_42 = arith.constant 2.000000e+00 : f32
    %85 = vector.broadcast %cst_41 : f32 to vector<8x4xf32>
    %86 = arith.maximumf %85, %84 : vector<8x4xf32>
    %87 = vector.broadcast %cst_42 : f32 to vector<8x4xf32>
    %88 = arith.minimumf %87, %86 : vector<8x4xf32>
    %89 = math.exp %88 : vector<8x4xf32>
    %90 = tpu.concatenate %83, %89 in 1 : vector<8x4xf32>, vector<8x4xf32> -> vector<8x8xf32>
    %c0_43 = arith.constant 0 : index
    %c0_44 = arith.constant 0 : index
    %91 = vector.load %arg5[%c0_43, %c0_44] : memref<8x8xf32, #tpu.memory_space<vmem>>, vector<8x8xf32>
    tpu.vector_store %arg5[%c0_43, %c0_44], %90 {strides = array<i32>} : memref<8x8xf32, #tpu.memory_space<vmem>>, vector<8x8xf32>,
    return
  }
}

</mosaic_0001>

<llo_original>
// kernel: pearl_agent_forward.1
$region0: #{pearl_agent_forward.1}
  #allocation0 [shape = 'u32[]', space=smem, size = 0x4, offset = 0x4, fixed_abs, tag = 'smem constant byte address 0x4 - core index']
  #allocation1 [shape = 'u32[144,128]{1,0:T(1,128)}', space=vmem, size = 0x12000, scoped, tag = 'internal scratch']
  %s0 = inlined_call_operand.vmem [shape: f32[16,16], index: 0, kind: input, shape index: {}]
  %s1 = inlined_call_operand.vmem [shape: f32[8,11], index: 1, kind: input, shape index: {}]
  %s2 = inlined_call_operand.vmem [shape: f32[2,8], index: 2, kind: input, shape index: {}]
  %s3 = inlined_call_operand.vmem [shape: bf16[144,32], index: 3, kind: input, shape index: {}]
  %s4 = inlined_call_operand.vmem [shape: f32[80,32], index: 4, kind: input, shape index: {}]
  %s5 = inlined_call_operand.vmem [shape: f32[8,8], index: 5, kind: output, shape index: {0}]
  %s6 = inlined_call_operand.vmem [shape: f32[2,24], index: 6, kind: output, shape index: {1}]
  %7 = xla_tuple %s5, %s6
  %s8 = sld [smem:[#allocation0]]
  $region38: #{pearl_agent_forward.1} parent=0
    _
  %s10 = ssub.s32 1, %s8
  %s11 = scalar_select 0, %s10, %s8
  // Predicated region
  $region2: #{pearl_agent_forward.1} parent=0 // pred_check
    _
  $region3: #{pearl_agent_forward.1} parent=0 // pred_check_branch
    %13 = sbr.rel (0) target = $region5
  $region4: #{pearl_agent_forward.1} parent=0 // pred_region
    _
  $region5: #{pearl_agent_forward.1} parent=0 // pred_fallthru
    _
  // Predicated region
  $region6: #{pearl_agent_forward.1} parent=0 // pred_check
    _
  $region7: #{pearl_agent_forward.1} parent=0 // pred_check_branch
    %15 = sbr.rel (0) target = $region9
  $region8: #{pearl_agent_forward.1} parent=0 // pred_region
    _
  $region9: #{pearl_agent_forward.1} parent=0 // pred_fallthru
    _
  // Predicated region
  $region10: #{pearl_agent_forward.1} parent=0 // pred_check
    _
  $region11: #{pearl_agent_forward.1} parent=0 // pred_check_branch
    %17 = sbr.rel (0) target = $region13
  $region12: #{pearl_agent_forward.1} parent=0 // pred_region
    _
  $region13: #{pearl_agent_forward.1} parent=0 // pred_fallthru
    _
  // Predicated region
  $region14: #{pearl_agent_forward.1} parent=0 // pred_check
    _
  $region15: #{pearl_agent_forward.1} parent=0 // pred_check_branch
    %19 = sbr.rel (0) target = $region17
  $region16: #{pearl_agent_forward.1} parent=0 // pred_region
    _
  $region17: #{pearl_agent_forward.1} parent=0 // pred_fallthru
    _
  // Predicated region
  $region18: #{pearl_agent_forward.1} parent=0 // pred_check
    _
  $region19: #{pearl_agent_forward.1} parent=0 // pred_check_branch
    %21 = sbr.rel (0) target = $region21
  $region20: #{pearl_agent_forward.1} parent=0 // pred_region
    _
  $region21: #{pearl_agent_forward.1} parent=0 // pred_fallthru
    _
  %v23 = vld [vmem:[%s0] sm:$0xff]
  %v24 = vld [vmem:[%s0 + $0x8] sm:$0xff]
  %v25 = vld [vmem:[%s3] sm:$0xf]
  %v26 = vld [vmem:[%s3 + $0x4] sm:$0xf]
  %v27 = vpack.c.bf16 %v24, %v23
  %v28 = vld [vmem:[%s4 + $0x20] sm:$0x1]
  %v29 = vlaneseq
  %v30 = vshrl.u32 %v29, 7
  %v31 = vsub.s32 0, %v30
  %v32 = vrot.slane %v28, %v31
  %v35 = vunpack.c.l.b16 %v25
  %v36 = vunpack.c.l.b16 %v26
  %v37 = vpack.c.b16 %v36, %v35
  %vm39 = vcmask 130048
  %v41 = vsel %vm39, %v27, 0
  %43 = vmatprep.subr.bf16.mxu0 0
  %44 = vmatpush1.bf16.msra.mxu0 0
  %45 = vmatprep.subr.bf16.mxu0 0
  %46 = vmatpush1.bf16.msra.mxu0 0
  %47 = vmatprep.subr.bf16.mxu0 0
  %48 = vmatpush1.bf16.msra.mxu0 0
  %49 = vmatprep.subr.bf16.mxu0 0
  %50 = vmatpush1.bf16.msra.mxu0 0
  %51 = vmatprep.subr.bf16.mxu0 0
  %52 = vmatpush1.bf16.msra.mxu0 0
  %53 = vmatprep.subr.bf16.mxu0 0
  %54 = vmatpush1.bf16.msra.mxu0 0
  %55 = vmatprep.subr.bf16.mxu0 0
  %56 = vmatpush1.bf16.msra.mxu0 0
  %57 = vmatprep.subr.bf16.mxu0 0
  %58 = vmatpush1.bf16.msra.mxu0 %v37
  %59 = vmatprep.subr.bf16.mxu0 0
  %60 = vmatpush2.bf16.msra.mxu0 0
  %61 = vmatprep.subr.bf16.mxu0 0
  %62 = vmatpush2.bf16.msra.mxu0 0
  %63 = vmatprep.subr.bf16.mxu0 0
  %64 = vmatpush2.bf16.msra.mxu0 0
  %65 = vmatprep.subr.bf16.mxu0 0
  %66 = vmatpush2.bf16.msra.mxu0 0
  %67 = vmatprep.subr.bf16.mxu0 0
  %68 = vmatpush2.bf16.msra.mxu0 0
  %69 = vmatprep.subr.bf16.mxu0 0
  %70 = vmatpush2.bf16.msra.mxu0 0
  %71 = vmatprep.subr.bf16.mxu0 0
  %72 = vmatpush2.bf16.msra.mxu0 0
  %73 = vmatprep.subr.bf16.mxu0 0
  %74 = vmatpush2.bf16.msra.mxu0 0
  %75 = vmatprep.mubr.bf16.mxu0 0
  %76 = vmatmul.mubr.bf16.gmra.mxu0 %v41
  %v77 = vpop.f32.mrf.mxu0
  %v78 = vadd.f32 %v32, %v77
  %v79 = vpop.f32.mrf.mxu0
  %v80 = vpop.f32.mrf.mxu0
  %v81 = vadd.f32 %v32, %v80
  %v82 = vpop.f32.mrf.mxu0
  %83 = vdwg.mxu0
  %v84 = vmax.f32 %v78, 0.0
  %v85 = vmax.f32 %v81, 0.0
  %v86 = vld [vmem:[%s3 + $0x8] sm:$0xf]
  %v87 = vld [vmem:[%s3 + $0xc] sm:$0xf]
  %v88 = vld [vmem:[%s3 + $0x10] sm:$0xf]
  %v89 = vld [vmem:[%s3 + $0x14] sm:$0xf]
  %v90 = vpack.c.bf16 %v85, %v84
  %v91 = vld [vmem:[%s4 + $0x28] sm:$0x1]
  %v92 = vlaneseq
  %v93 = vshrl.u32 %v92, 7
  %v94 = vsub.s32 0, %v93
  %v95 = vrot.slane %v91, %v94
  %v100 = vunpack.c.l.b16 %v86
  %v101 = vunpack.c.l.b16 %v87
  %v102 = vunpack.c.l.b16 %v88
  %v103 = vunpack.c.l.b16 %v89
  %v104 = vpack.c.b16 %v101, %v100
  %v105 = vpack.c.b16 %v103, %v102
  %vm108 = vcmask 261120
  %v110 = vsel %vm108, %v90, 0
  %112 = vmatprep.subr.bf16.mxu0 0
  %113 = vmatpush1.bf16.msra.mxu0 0
  %114 = vmatprep.subr.bf16.mxu0 0
  %115 = vmatpush1.bf16.msra.mxu0 0
  %116 = vmatprep.subr.bf16.mxu0 0
  %117 = vmatpush1.bf16.msra.mxu0 0
  %118 = vmatprep.subr.bf16.mxu0 0
  %119 = vmatpush1.bf16.msra.mxu0 0
  %120 = vmatprep.subr.bf16.mxu0 0
  %121 = vmatpush1.bf16.msra.mxu0 0
  %122 = vmatprep.subr.bf16.mxu0 0
  %123 = vmatpush1.bf16.msra.mxu0 0
  %124 = vmatprep.subr.bf16.mxu0 0
  %125 = vmatpush1.bf16.msra.mxu0 %v105
  %126 = vmatprep.subr.bf16.mxu0 0
  %127 = vmatpush1.bf16.msra.mxu0 %v104
  %128 = vmatprep.subr.bf16.mxu0 0
  %129 = vmatpush2.bf16.msra.mxu0 0
  %130 = vmatprep.subr.bf16.mxu0 0
  %131 = vmatpush2.bf16.msra.mxu0 0
  %132 = vmatprep.subr.bf16.mxu0 0
  %133 = vmatpush2.bf16.msra.mxu0 0
  %134 = vmatprep.subr.bf16.mxu0 0
  %135 = vmatpush2.bf16.msra.mxu0 0
  %136 = vmatprep.subr.bf16.mxu0 0
  %137 = vmatpush2.bf16.msra.mxu0 0
  %138 = vmatprep.subr.bf16.mxu0 0
  %139 = vmatpush2.bf16.msra.mxu0 0
  %140 = vmatprep.subr.bf16.mxu0 0
  %141 = vmatpush2.bf16.msra.mxu0 0
  %142 = vmatprep.subr.bf16.mxu0 0
  %143 = vmatpush2.bf16.msra.mxu0 0
  %144 = vmatprep.mubr.bf16.mxu0 0
  %145 = vmatmul.mubr.bf16.gmra.mxu0 %v110
  %v146 = vpop.f32.mrf.mxu0
  %v147 = vadd.f32 %v95, %v146
  %v148 = vpop.f32.mrf.mxu0
  %v149 = vpop.f32.mrf.mxu0
  %v150 = vadd.f32 %v95, %v149
  %v151 = vpop.f32.mrf.mxu0
  %152 = vdwg.mxu0
  %v153 = vmax.f32 %v147, 0.0
  %v154 = vmax.f32 %v150, 0.0
  %v155 = vld [vmem:[%s4] sm:$0xff]
  %v156 = vld [vmem:[%s4 + $0x8] sm:$0xff]
  %v157 = vld [vmem:[%s4 + $0x10] sm:$0xff]
  %v158 = vld [vmem:[%s4 + $0x18] sm:$0xff]
  %v159 = vld [vmem:[%s4 + $0x30] sm:$0x1]
  %v160 = vlaneseq
  %v161 = vshrl.u32 %v160, 7
  %v162 = vsub.s32 0, %v161
  %v163 = vrot.slane %v159, %v162
  %v165 = vsel %vm108, %v153, 0
  %v168 = vsel %vm108, %v154, 0
  %170 = vmatprep.subr.mxu0 0.0
  %171 = vmatpush1.msra.mxu0 0.0
  %172 = vmatprep.subr.mxu0 0.0
  %173 = vmatpush1.msra.mxu0 0.0
  %174 = vmatprep.subr.mxu0 0.0
  %175 = vmatpush1.msra.mxu0 0.0
  %176 = vmatprep.subr.mxu0 0.0
  %177 = vmatpush1.msra.mxu0 0.0
  %178 = vmatprep.subr.mxu0 0.0
  %179 = vmatpush1.msra.mxu0 0.0
  %180 = vmatprep.subr.mxu0 0.0
  %181 = vmatpush1.msra.mxu0 0.0
  %182 = vmatprep.subr.mxu0 0.0
  %183 = vmatpush1.msra.mxu0 0.0
  %184 = vmatprep.subr.mxu0 0.0
  %185 = vmatpush1.msra.mxu0 0.0
  %186 = vmatprep.subr.mxu0 0.0
  %187 = vmatpush1.msra.mxu0 0.0
  %188 = vmatprep.subr.mxu0 0.0
  %189 = vmatpush1.msra.mxu0 0.0
  %190 = vmatprep.subr.mxu0 0.0
  %191 = vmatpush1.msra.mxu0 0.0
  %192 = vmatprep.subr.mxu0 0.0
  %193 = vmatpush1.msra.mxu0 0.0
  %194 = vmatprep.subr.mxu0 0.0
  %v195 = vand.u32 %v158, 4294901760
  %196 = vmatpush1.msra.mxu0 %v195
  %197 = vmatprep.subr.mxu0 0.0
  %v198 = vand.u32 %v157, 4294901760
  %199 = vmatpush1.msra.mxu0 %v198
  %200 = vmatprep.subr.mxu0 0.0
  %v201 = vand.u32 %v156, 4294901760
  %202 = vmatpush1.msra.mxu0 %v201
  %203 = vmatprep.subr.mxu0 0.0
  %v204 = vand.u32 %v155, 4294901760
  %205 = vmatpush1.msra.mxu0 %v204
  %206 = vmatprep.subr.mxu0 0.0
  %207 = vmatpush2.msra.mxu0 0.0
  %208 = vmatprep.subr.mxu0 0.0
  %209 = vmatpush2.msra.mxu0 0.0
  %210 = vmatprep.subr.mxu0 0.0
  %211 = vmatpush2.msra.mxu0 0.0
  %212 = vmatprep.subr.mxu0 0.0
  %213 = vmatpush2.msra.mxu0 0.0
  %214 = vmatprep.subr.mxu0 0.0
  %215 = vmatpush2.msra.mxu0 0.0
  %216 = vmatprep.subr.mxu0 0.0
  %217 = vmatpush2.msra.mxu0 0.0
  %218 = vmatprep.subr.mxu0 0.0
  %219 = vmatpush2.msra.mxu0 0.0
  %220 = vmatprep.subr.mxu0 0.0
  %221 = vmatpush2.msra.mxu0 0.0
  %222 = vmatprep.subr.mxu0 0.0
  %223 = vmatpush2.msra.mxu0 0.0
  %224 = vmatprep.subr.mxu0 0.0
  %225 = vmatpush2.msra.mxu0 0.0
  %226 = vmatprep.subr.mxu0 0.0
  %227 = vmatpush2.msra.mxu0 0.0
  %228 = vmatprep.subr.mxu0 0.0
  %229 = vmatpush2.msra.mxu0 0.0
  %230 = vmatprep.subr.mxu0 0.0
  %231 = vmatpush2.msra.mxu0 0.0
  %232 = vmatprep.subr.mxu0 0.0
  %233 = vmatpush2.msra.mxu0 0.0
  %234 = vmatprep.subr.mxu0 0.0
  %235 = vmatpush2.msra.mxu0 0.0
  %236 = vmatprep.subr.mxu0 0.0
  %237 = vmatpush2.msra.mxu0 0.0
  %238 = vmatprep.mubr.f32.mxu0 0.0
  %v239 = vand.u32 %v165, 4294901760
  %v240 = vsub.f32 %v165, %v239
  %v241 = vand.u32 %v240, 4294901760
  %v242 = vsub.f32 %v240, %v241
  %v243 = vand.u32 %v242, 4294901760
  %244 = vmatmul.mubr.f32.gmra.mxu0 %v243
  %v245 = vpop.f32.mrf.mxu0
  %v246 = vadd.f32 %v163, %v245
  %v247 = vpop.f32.mrf.mxu0
  %248 = vmatprep.mubr.f32.mxu0 0.0
  %v249 = vand.u32 %v168, 4294901760
  %v250 = vsub.f32 %v168, %v249
  %v251 = vand.u32 %v250, 4294901760
  %v252 = vsub.f32 %v250, %v251
  %v253 = vand.u32 %v252, 4294901760
  %254 = vmatmul.mubr.f32.gmra.mxu0 %v253
  %v255 = vpop.f32.mrf.mxu0
  %v256 = vadd.f32 %v163, %v255
  %v257 = vpop.f32.mrf.mxu0
  %258 = vdwg.mxu0
  %259 = vmatprep.subr.mxu0 0.0
  %260 = vmatpush1.msra.mxu0 0.0
  %261 = vmatprep.subr.mxu0 0.0
  %262 = vmatpush1.msra.mxu0 0.0
  %263 = vmatprep.subr.mxu0 0.0
  %264 = vmatpush1.msra.mxu0 0.0
  %265 = vmatprep.subr.mxu0 0.0
  %266 = vmatpush1.msra.mxu0 0.0
  %267 = vmatprep.subr.mxu0 0.0
  %268 = vmatpush1.msra.mxu0 0.0
  %269 = vmatprep.subr.mxu0 0.0
  %270 = vmatpush1.msra.mxu0 0.0
  %271 = vmatprep.subr.mxu0 0.0
  %272 = vmatpush1.msra.mxu0 0.0
  %273 = vmatprep.subr.mxu0 0.0
  %274 = vmatpush1.msra.mxu0 0.0
  %275 = vmatprep.subr.mxu0 0.0
  %276 = vmatpush1.msra.mxu0 0.0
  %277 = vmatprep.subr.mxu0 0.0
  %278 = vmatpush1.msra.mxu0 0.0
  %279 = vmatprep.subr.mxu0 0.0
  %280 = vmatpush1.msra.mxu0 0.0
  %281 = vmatprep.subr.mxu0 0.0
  %282 = vmatpush1.msra.mxu0 0.0
  %283 = vmatprep.subr.mxu0 0.0
  %v284 = vand.u32 %v158, 4294901760
  %v285 = vsub.f32 %v158, %v284
  %v286 = vand.u32 %v285, 4294901760
  %v287 = vsub.f32 %v285, %v286
  %v288 = vand.u32 %v287, 4294901760
  %289 = vmatpush1.msra.mxu0 %v288
  %290 = vmatprep.subr.mxu0 0.0
  %v291 = vand.u32 %v157, 4294901760
  %v292 = vsub.f32 %v157, %v291
  %v293 = vand.u32 %v292, 4294901760
  %v294 = vsub.f32 %v292, %v293
  %v295 = vand.u32 %v294, 4294901760
  %296 = vmatpush1.msra.mxu0 %v295
  %297 = vmatprep.subr.mxu0 0.0
  %v298 = vand.u32 %v156, 4294901760
  %v299 = vsub.f32 %v156, %v298
  %v300 = vand.u32 %v299, 4294901760
  %v301 = vsub.f32 %v299, %v300
  %v302 = vand.u32 %v301, 4294901760
  %303 = vmatpush1.msra.mxu0 %v302
  %304 = vmatprep.subr.mxu0 0.0
  %v305 = vand.u32 %v155, 4294901760
  %v306 = vsub.f32 %v155, %v305
  %v307 = vand.u32 %v306, 4294901760
  %v308 = vsub.f32 %v306, %v307
  %v309 = vand.u32 %v308, 4294901760
  %310 = vmatpush1.msra.mxu0 %v309
  %311 = vmatprep.subr.mxu0 0.0
  %312 = vmatpush2.msra.mxu0 0.0
  %313 = vmatprep.subr.mxu0 0.0
  %314 = vmatpush2.msra.mxu0 0.0
  %315 = vmatprep.subr.mxu0 0.0
  %316 = vmatpush2.msra.mxu0 0.0
  %317 = vmatprep.subr.mxu0 0.0
  %318 = vmatpush2.msra.mxu0 0.0
  %319 = vmatprep.subr.mxu0 0.0
  %320 = vmatpush2.msra.mxu0 0.0
  %321 = vmatprep.subr.mxu0 0.0
  %322 = vmatpush2.msra.mxu0 0.0
  %323 = vmatprep.subr.mxu0 0.0
  %324 = vmatpush2.msra.mxu0 0.0
  %325 = vmatprep.subr.mxu0 0.0
  %326 = vmatpush2.msra.mxu0 0.0
  %327 = vmatprep.subr.mxu0 0.0
  %328 = vmatpush2.msra.mxu0 0.0
  %329 = vmatprep.subr.mxu0 0.0
  %330 = vmatpush2.msra.mxu0 0.0
  %331 = vmatprep.subr.mxu0 0.0
  %332 = vmatpush2.msra.mxu0 0.0
  %333 = vmatprep.subr.mxu0 0.0
  %334 = vmatpush2.msra.mxu0 0.0
  %335 = vmatprep.subr.mxu0 0.0
  %336 = vmatpush2.msra.mxu0 0.0
  %337 = vmatprep.subr.mxu0 0.0
  %338 = vmatpush2.msra.mxu0 0.0
  %339 = vmatprep.subr.mxu0 0.0
  %340 = vmatpush2.msra.mxu0 0.0
  %341 = vmatprep.subr.mxu0 0.0
  %342 = vmatpush2.msra.mxu0 0.0
  %343 = vmatprep.mubr.f32.mxu0 0.0
  %v344 = vand.u32 %v165, 4294901760
  %345 = vmatmul.mubr.f32.gmra.mxu0 %v344
  %v346 = vpop.f32.mrf.mxu0
  %v347 = vadd.f32 %v246, %v346
  %v348 = vpop.f32.mrf.mxu0
  %349 = vmatprep.mubr.f32.mxu0 0.0
  %v350 = vand.u32 %v168, 4294901760
  %351 = vmatmul.mubr.f32.gmra.mxu0 %v350
  %v352 = vpop.f32.mrf.mxu0
  %v353 = vadd.f32 %v256, %v352
  %v354 = vpop.f32.mrf.mxu0
  %355 = vdwg.mxu0
  %356 = vmatprep.subr.mxu0 0.0
  %357 = vmatpush1.msra.mxu0 0.0
  %358 = vmatprep.subr.mxu0 0.0
  %359 = vmatpush1.msra.mxu0 0.0
  %360 = vmatprep.subr.mxu0 0.0
  %361 = vmatpush1.msra.mxu0 0.0
  %362 = vmatprep.subr.mxu0 0.0
  %363 = vmatpush1.msra.mxu0 0.0
  %364 = vmatprep.subr.mxu0 0.0
  %365 = vmatpush1.msra.mxu0 0.0
  %366 = vmatprep.subr.mxu0 0.0
  %367 = vmatpush1.msra.mxu0 0.0
  %368 = vmatprep.subr.mxu0 0.0
  %369 = vmatpush1.msra.mxu0 0.0
  %370 = vmatprep.subr.mxu0 0.0
  %371 = vmatpush1.msra.mxu0 0.0
  %372 = vmatprep.subr.mxu0 0.0
  %373 = vmatpush1.msra.mxu0 0.0
  %374 = vmatprep.subr.mxu0 0.0
  %375 = vmatpush1.msra.mxu0 0.0
  %376 = vmatprep.subr.mxu0 0.0
  %377 = vmatpush1.msra.mxu0 0.0
  %378 = vmatprep.subr.mxu0 0.0
  %379 = vmatpush1.msra.mxu0 0.0
  %380 = vmatprep.subr.mxu0 0.0
  %v381 = vand.u32 %v158, 4294901760
  %v382 = vsub.f32 %v158, %v381
  %383 = vmatpush1.msra.mxu0 %v382
  %384 = vmatprep.subr.mxu0 0.0
  %v385 = vand.u32 %v157, 4294901760
  %v386 = vsub.f32 %v157, %v385
  %387 = vmatpush1.msra.mxu0 %v386
  %388 = vmatprep.subr.mxu0 0.0
  %v389 = vand.u32 %v156, 4294901760
  %v390 = vsub.f32 %v156, %v389
  %391 = vmatpush1.msra.mxu0 %v390
  %392 = vmatprep.subr.mxu0 0.0
  %v393 = vand.u32 %v155, 4294901760
  %v394 = vsub.f32 %v155, %v393
  %395 = vmatpush1.msra.mxu0 %v394
  %396 = vmatprep.subr.mxu0 0.0
  %397 = vmatpush2.msra.mxu0 0.0
  %398 = vmatprep.subr.mxu0 0.0
  %399 = vmatpush2.msra.mxu0 0.0
  %400 = vmatprep.subr.mxu0 0.0
  %401 = vmatpush2.msra.mxu0 0.0
  %402 = vmatprep.subr.mxu0 0.0
  %403 = vmatpush2.msra.mxu0 0.0
  %404 = vmatprep.subr.mxu0 0.0
  %405 = vmatpush2.msra.mxu0 0.0
  %406 = vmatprep.subr.mxu0 0.0
  %407 = vmatpush2.msra.mxu0 0.0
  %408 = vmatprep.subr.mxu0 0.0
  %409 = vmatpush2.msra.mxu0 0.0
  %410 = vmatprep.subr.mxu0 0.0
  %411 = vmatpush2.msra.mxu0 0.0
  %412 = vmatprep.subr.mxu0 0.0
  %413 = vmatpush2.msra.mxu0 0.0
  %414 = vmatprep.subr.mxu0 0.0
  %415 = vmatpush2.msra.mxu0 0.0
  %416 = vmatprep.subr.mxu0 0.0
  %417 = vmatpush2.msra.mxu0 0.0
  %418 = vmatprep.subr.mxu0 0.0
  %419 = vmatpush2.msra.mxu0 0.0
  %420 = vmatprep.subr.mxu0 0.0
  %421 = vmatpush2.msra.mxu0 0.0
  %422 = vmatprep.subr.mxu0 0.0
  %423 = vmatpush2.msra.mxu0 0.0
  %424 = vmatprep.subr.mxu0 0.0
  %425 = vmatpush2.msra.mxu0 0.0
  %426 = vmatprep.subr.mxu0 0.0
  %427 = vmatpush2.msra.mxu0 0.0
  %428 = vmatprep.mubr.f32.mxu0 0.0
  %v429 = vand.u32 %v165, 4294901760
  %v430 = vsub.f32 %v165, %v429
  %431 = vmatmul.mubr.f32.gmra.mxu0 %v430
  %v432 = vpop.f32.mrf.mxu0
  %v433 = vadd.f32 %v347, %v432
  %v434 = vpop.f32.mrf.mxu0
  %435 = vmatprep.mubr.f32.mxu0 0.0
  %v436 = vand.u32 %v168, 4294901760
  %v437 = vsub.f32 %v168, %v436
  %438 = vmatmul.mubr.f32.gmra.mxu0 %v437
  %v439 = vpop.f32.mrf.mxu0
  %v440 = vadd.f32 %v353, %v439
  %v441 = vpop.f32.mrf.mxu0
  %442 = vdwg.mxu0
  %443 = vmatprep.subr.mxu0 0.0
  %444 = vmatpush1.msra.mxu0 0.0
  %445 = vmatprep.subr.mxu0 0.0
  %446 = vmatpush1.msra.mxu0 0.0
  %447 = vmatprep.subr.mxu0 0.0
  %448 = vmatpush1.msra.mxu0 0.0
  %449 = vmatprep.subr.mxu0 0.0
  %450 = vmatpush1.msra.mxu0 0.0
  %451 = vmatprep.subr.mxu0 0.0
  %452 = vmatpush1.msra.mxu0 0.0
  %453 = vmatprep.subr.mxu0 0.0
  %454 = vmatpush1.msra.mxu0 0.0
  %455 = vmatprep.subr.mxu0 0.0
  %456 = vmatpush1.msra.mxu0 0.0
  %457 = vmatprep.subr.mxu0 0.0
  %458 = vmatpush1.msra.mxu0 0.0
  %459 = vmatprep.subr.mxu0 0.0
  %460 = vmatpush1.msra.mxu0 0.0
  %461 = vmatprep.subr.mxu0 0.0
  %462 = vmatpush1.msra.mxu0 0.0
  %463 = vmatprep.subr.mxu0 0.0
  %464 = vmatpush1.msra.mxu0 0.0
  %465 = vmatprep.subr.mxu0 0.0
  %466 = vmatpush1.msra.mxu0 0.0
  %467 = vmatprep.subr.mxu0 0.0
  %v468 = vand.u32 %v158, 4294901760
  %469 = vmatpush1.msra.mxu0 %v468
  %470 = vmatprep.subr.mxu0 0.0
  %v471 = vand.u32 %v157, 4294901760
  %472 = vmatpush1.msra.mxu0 %v471
  %473 = vmatprep.subr.mxu0 0.0
  %v474 = vand.u32 %v156, 4294901760
  %475 = vmatpush1.msra.mxu0 %v474
  %476 = vmatprep.subr.mxu0 0.0
  %v477 = vand.u32 %v155, 4294901760
  %478 = vmatpush1.msra.mxu0 %v477
  %479 = vmatprep.subr.mxu0 0.0
  %480 = vmatpush2.msra.mxu0 0.0
  %481 = vmatprep.subr.mxu0 0.0
  %482 = vmatpush2.msra.mxu0 0.0
  %483 = vmatprep.subr.mxu0 0.0
  %484 = vmatpush2.msra.mxu0 0.0
  %485 = vmatprep.subr.mxu0 0.0
  %486 = vmatpush2.msra.mxu0 0.0
  %487 = vmatprep.subr.mxu0 0.0
  %488 = vmatpush2.msra.mxu0 0.0
  %489 = vmatprep.subr.mxu0 0.0
  %490 = vmatpush2.msra.mxu0 0.0
  %491 = vmatprep.subr.mxu0 0.0
  %492 = vmatpush2.msra.mxu0 0.0
  %493 = vmatprep.subr.mxu0 0.0
  %494 = vmatpush2.msra.mxu0 0.0
  %495 = vmatprep.subr.mxu0 0.0
  %496 = vmatpush2.msra.mxu0 0.0
  %497 = vmatprep.subr.mxu0 0.0
  %498 = vmatpush2.msra.mxu0 0.0
  %499 = vmatprep.subr.mxu0 0.0
  %500 = vmatpush2.msra.mxu0 0.0
  %501 = vmatprep.subr.mxu0 0.0
  %502 = vmatpush2.msra.mxu0 0.0
  %503 = vmatprep.subr.mxu0 0.0
  %504 = vmatpush2.msra.mxu0 0.0
  %505 = vmatprep.subr.mxu0 0.0
  %506 = vmatpush2.msra.mxu0 0.0
  %507 = vmatprep.subr.mxu0 0.0
  %508 = vmatpush2.msra.mxu0 0.0
  %509 = vmatprep.subr.mxu0 0.0
  %510 = vmatpush2.msra.mxu0 0.0
  %511 = vmatprep.mubr.f32.mxu0 0.0
  %v512 = vand.u32 %v165, 4294901760
  %v513 = vsub.f32 %v165, %v512
  %v514 = vand.u32 %v513, 4294901760
  %515 = vmatmul.mubr.f32.gmra.mxu0 %v514
  %v516 = vpop.f32.mrf.mxu0
  %v517 = vadd.f32 %v433, %v516
  %v518 = vpop.f32.mrf.mxu0
  %519 = vmatprep.mubr.f32.mxu0 0.0
  %v520 = vand.u32 %v168, 4294901760
  %v521 = vsub.f32 %v168, %v520
  %v522 = vand.u32 %v521, 4294901760
  %523 = vmatmul.mubr.f32.gmra.mxu0 %v522
  %v524 = vpop.f32.mrf.mxu0
  %v525 = vadd.f32 %v440, %v524
  %v526 = vpop.f32.mrf.mxu0
  %527 = vdwg.mxu0
  %528 = vmatprep.subr.mxu0 0.0
  %529 = vmatpush1.msra.mxu0 0.0
  %530 = vmatprep.subr.mxu0 0.0
  %531 = vmatpush1.msra.mxu0 0.0
  %532 = vmatprep.subr.mxu0 0.0
  %533 = vmatpush1.msra.mxu0 0.0
  %534 = vmatprep.subr.mxu0 0.0
  %535 = vmatpush1.msra.mxu0 0.0
  %536 = vmatprep.subr.mxu0 0.0
  %537 = vmatpush1.msra.mxu0 0.0
  %538 = vmatprep.subr.mxu0 0.0
  %539 = vmatpush1.msra.mxu0 0.0
  %540 = vmatprep.subr.mxu0 0.0
  %541 = vmatpush1.msra.mxu0 0.0
  %542 = vmatprep.subr.mxu0 0.0
  %543 = vmatpush1.msra.mxu0 0.0
  %544 = vmatprep.subr.mxu0 0.0
  %545 = vmatpush1.msra.mxu0 0.0
  %546 = vmatprep.subr.mxu0 0.0
  %547 = vmatpush1.msra.mxu0 0.0
  %548 = vmatprep.subr.mxu0 0.0
  %549 = vmatpush1.msra.mxu0 0.0
  %550 = vmatprep.subr.mxu0 0.0
  %551 = vmatpush1.msra.mxu0 0.0
  %552 = vmatprep.subr.mxu0 0.0
  %v553 = vand.u32 %v158, 4294901760
  %v554 = vsub.f32 %v158, %v553
  %v555 = vand.u32 %v554, 4294901760
  %556 = vmatpush1.msra.mxu0 %v555
  %557 = vmatprep.subr.mxu0 0.0
  %v558 = vand.u32 %v157, 4294901760
  %v559 = vsub.f32 %v157, %v558
  %v560 = vand.u32 %v559, 4294901760
  %561 = vmatpush1.msra.mxu0 %v560
  %562 = vmatprep.subr.mxu0 0.0
  %v563 = vand.u32 %v156, 4294901760
  %v564 = vsub.f32 %v156, %v563
  %v565 = vand.u32 %v564, 4294901760
  %566 = vmatpush1.msra.mxu0 %v565
  %567 = vmatprep.subr.mxu0 0.0
  %v568 = vand.u32 %v155, 4294901760
  %v569 = vsub.f32 %v155, %v568
  %v570 = vand.u32 %v569, 4294901760
  %571 = vmatpush1.msra.mxu0 %v570
  %572 = vmatprep.subr.mxu0 0.0
  %573 = vmatpush2.msra.mxu0 0.0
  %574 = vmatprep.subr.mxu0 0.0
  %575 = vmatpush2.msra.mxu0 0.0
  %576 = vmatprep.subr.mxu0 0.0
  %577 = vmatpush2.msra.mxu0 0.0
  %578 = vmatprep.subr.mxu0 0.0
  %579 = vmatpush2.msra.mxu0 0.0
  %580 = vmatprep.subr.mxu0 0.0
  %581 = vmatpush2.msra.mxu0 0.0
  %582 = vmatprep.subr.mxu0 0.0
  %583 = vmatpush2.msra.mxu0 0.0
  %584 = vmatprep.subr.mxu0 0.0
  %585 = vmatpush2.msra.mxu0 0.0
  %586 = vmatprep.subr.mxu0 0.0
  %587 = vmatpush2.msra.mxu0 0.0
  %588 = vmatprep.subr.mxu0 0.0
  %589 = vmatpush2.msra.mxu0 0.0
  %590 = vmatprep.subr.mxu0 0.0
  %591 = vmatpush2.msra.mxu0 0.0
  %592 = vmatprep.subr.mxu0 0.0
  %593 = vmatpush2.msra.mxu0 0.0
  %594 = vmatprep.subr.mxu0 0.0
  %595 = vmatpush2.msra.mxu0 0.0
  %596 = vmatprep.subr.mxu0 0.0
  %597 = vmatpush2.msra.mxu0 0.0
  %598 = vmatprep.subr.mxu0 0.0
  %599 = vmatpush2.msra.mxu0 0.0
  %600 = vmatprep.subr.mxu0 0.0
  %601 = vmatpush2.msra.mxu0 0.0
  %602 = vmatprep.subr.mxu0 0.0
  %603 = vmatpush2.msra.mxu0 0.0
  %604 = vmatprep.mubr.f32.mxu0 0.0
  %v605 = vand.u32 %v165, 4294901760
  %606 = vmatmul.mubr.f32.gmra.mxu0 %v605
  %v607 = vpop.f32.mrf.mxu0
  %v608 = vadd.f32 %v517, %v607
  %v609 = vpop.f32.mrf.mxu0
  %610 = vmatprep.mubr.f32.mxu0 0.0
  %v611 = vand.u32 %v168, 4294901760
  %612 = vmatmul.mubr.f32.gmra.mxu0 %v611
  %v613 = vpop.f32.mrf.mxu0
  %v614 = vadd.f32 %v525, %v613
  %v615 = vpop.f32.mrf.mxu0
  %616 = vdwg.mxu0
  %617 = vmatprep.subr.mxu0 0.0
  %618 = vmatpush1.msra.mxu0 0.0
  %619 = vmatprep.subr.mxu0 0.0
  %620 = vmatpush1.msra.mxu0 0.0
  %621 = vmatprep.subr.mxu0 0.0
  %622 = vmatpush1.msra.mxu0 0.0
  %623 = vmatprep.subr.mxu0 0.0
  %624 = vmatpush1.msra.mxu0 0.0
  %625 = vmatprep.subr.mxu0 0.0
  %626 = vmatpush1.msra.mxu0 0.0
  %627 = vmatprep.subr.mxu0 0.0
  %628 = vmatpush1.msra.mxu0 0.0
  %629 = vmatprep.subr.mxu0 0.0
  %630 = vmatpush1.msra.mxu0 0.0
  %631 = vmatprep.subr.mxu0 0.0
  %632 = vmatpush1.msra.mxu0 0.0
  %633 = vmatprep.subr.mxu0 0.0
  %634 = vmatpush1.msra.mxu0 0.0
  %635 = vmatprep.subr.mxu0 0.0
  %636 = vmatpush1.msra.mxu0 0.0
  %637 = vmatprep.subr.mxu0 0.0
  %638 = vmatpush1.msra.mxu0 0.0
  %639 = vmatprep.subr.mxu0 0.0
  %640 = vmatpush1.msra.mxu0 0.0
  %641 = vmatprep.subr.mxu0 0.0
  %v642 = vand.u32 %v158, 4294901760
  %643 = vmatpush1.msra.mxu0 %v642
  %644 = vmatprep.subr.mxu0 0.0
  %v645 = vand.u32 %v157, 4294901760
  %646 = vmatpush1.msra.mxu0 %v645
  %647 = vmatprep.subr.mxu0 0.0
  %v648 = vand.u32 %v156, 4294901760
  %649 = vmatpush1.msra.mxu0 %v648
  %650 = vmatprep.subr.mxu0 0.0
  %v651 = vand.u32 %v155, 4294901760
  %652 = vmatpush1.msra.mxu0 %v651
  %653 = vmatprep.subr.mxu0 0.0
  %654 = vmatpush2.msra.mxu0 0.0
  %655 = vmatprep.subr.mxu0 0.0
  %656 = vmatpush2.msra.mxu0 0.0
  %657 = vmatprep.subr.mxu0 0.0
  %658 = vmatpush2.msra.mxu0 0.0
  %659 = vmatprep.subr.mxu0 0.0
  %660 = vmatpush2.msra.mxu0 0.0
  %661 = vmatprep.subr.mxu0 0.0
  %662 = vmatpush2.msra.mxu0 0.0
  %663 = vmatprep.subr.mxu0 0.0
  %664 = vmatpush2.msra.mxu0 0.0
  %665 = vmatprep.subr.mxu0 0.0
  %666 = vmatpush2.msra.mxu0 0.0
  %667 = vmatprep.subr.mxu0 0.0
  %668 = vmatpush2.msra.mxu0 0.0
  %669 = vmatprep.subr.mxu0 0.0
  %670 = vmatpush2.msra.mxu0 0.0
  %671 = vmatprep.subr.mxu0 0.0
  %672 = vmatpush2.msra.mxu0 0.0
  %673 = vmatprep.subr.mxu0 0.0
  %674 = vmatpush2.msra.mxu0 0.0
  %675 = vmatprep.subr.mxu0 0.0
  %676 = vmatpush2.msra.mxu0 0.0
  %677 = vmatprep.subr.mxu0 0.0
  %678 = vmatpush2.msra.mxu0 0.0
  %679 = vmatprep.subr.mxu0 0.0
  %680 = vmatpush2.msra.mxu0 0.0
  %681 = vmatprep.subr.mxu0 0.0
  %682 = vmatpush2.msra.mxu0 0.0
  %683 = vmatprep.subr.mxu0 0.0
  %684 = vmatpush2.msra.mxu0 0.0
  %685 = vmatprep.mubr.f32.mxu0 0.0
  %v686 = vand.u32 %v165, 4294901760
  %687 = vmatmul.mubr.f32.gmra.mxu0 %v686
  %v688 = vpop.f32.mrf.mxu0
  %v689 = vadd.f32 %v608, %v688
  %v690 = vpop.f32.mrf.mxu0
  %691 = vmatprep.mubr.f32.mxu0 0.0
  %v692 = vand.u32 %v168, 4294901760
  %693 = vmatmul.mubr.f32.gmra.mxu0 %v692
  %v694 = vpop.f32.mrf.mxu0
  %v695 = vadd.f32 %v614, %v694
  %v696 = vpop.f32.mrf.mxu0
  %697 = vdwg.mxu0
  %vm698 = vcmp.gt.f32.partialorder %v689, 20.0
  %vm699 = vcmp.gt.f32.partialorder %v695, 20.0
  %v700 = vmin.f32 %v689, 20.0
  %v701 = vmin.f32 %v695, 20.0
  %v702 = vmul.f32 %v700, 1.442695
  %v703 = vpow.pop %v702
  %v704 = vmul.f32 %v701, 1.442695
  %v705 = vpow.pop %v704
  %v706 = vadd.f32 %v703, 1.0
  %v707 = vlog2.pop %v706
  %v708 = vmul.f32 %v707, 0.6931472
  %v709 = vmul.f32 -0.5, %v703
  %v710 = vadd.f32 %v709, 1.0
  %v711 = vmul.f32 %v710, %v703
  %v712 = vand.u32 2147483647, %v703
  %vm713 = vcmp.lt.f32.partialorder %v712, 0.0004427343
  %v714 = vsel %vm713, %v711, %v708
  %v715 = vadd.f32 %v705, 1.0
  %v716 = vlog2.pop %v715
  %v717 = vmul.f32 %v716, 0.6931472
  %v718 = vmul.f32 -0.5, %v705
  %v719 = vadd.f32 %v718, 1.0
  %v720 = vmul.f32 %v719, %v705
  %v721 = vand.u32 2147483647, %v705
  %vm722 = vcmp.lt.f32.partialorder %v721, 0.0004427343
  %v723 = vsel %vm722, %v720, %v717
  %v724 = vsel %vm698, %v689, %v714
  %v725 = vsel %vm699, %v695, %v723
  %v726 = vmax.f32 %v724, 1e-07
  %v727 = vmax.f32 %v725, 1e-07
  %v728 = vrcp.pop %v726
  %v729 = vmul.f32 1.0, %v728
  %v730 = vrcp.pop %v727
  %v731 = vmul.f32 1.0, %v730
  %vm732 = vcmask 130112
  %v733 = vsel %vm732, %v729, 0.0
  %v734 = vrot.slane %v733, 4
  %v735 = vadd.f32 %v733, %v734
  %v736 = vrot.slane %v735, 2
  %v737 = vadd.f32 %v735, %v736
  %v738 = vrot.slane %v737, 1
  %v739 = vadd.f32 %v737, %v738
  %v740 = vsel %vm732, %v731, 0.0
  %v741 = vrot.slane %v740, 4
  %v742 = vadd.f32 %v740, %v741
  %v743 = vrot.slane %v742, 2
  %v744 = vadd.f32 %v742, %v743
  %v745 = vrot.slane %v744, 1
  %v746 = vadd.f32 %v744, %v745
  %749 = vrot.lane.b32.xlu0 %v729, 120
  %v750 = vpop.permute.xlu0 %749
  %751 = vrot.lane.b32.xlu0 %v731, 120
  %v752 = vpop.permute.xlu0 %751
  %v755 = vmul.f32 %v689, %v750
  %v756 = vmul.f32 %v695, %v752
  %vm757 = vcmask 64512
  %v758 = vsel %vm757, %v755, 0.0
  %v759 = vrot.slane %v758, 4
  %v760 = vadd.f32 %v758, %v759
  %v761 = vrot.slane %v760, 2
  %v762 = vadd.f32 %v760, %v761
  %v763 = vrot.slane %v762, 1
  %v764 = vadd.f32 %v762, %v763
  %v765 = vsel %vm757, %v756, 0.0
  %v766 = vrot.slane %v765, 4
  %v767 = vadd.f32 %v765, %v766
  %v768 = vrot.slane %v767, 2
  %v769 = vadd.f32 %v767, %v768
  %v770 = vrot.slane %v769, 1
  %v771 = vadd.f32 %v769, %v770
  %v772 = vrcp.pop %v739
  %v773 = vmul.f32 1.0, %v772
  %v774 = vrcp.pop %v746
  %v775 = vmul.f32 1.0, %v774
  %778 = vrot.lane.b32.xlu0 %v764, 8
  %v779 = vpop.permute.xlu0 %778
  %780 = vrot.lane.b32.xlu0 %v771, 8
  %v781 = vpop.permute.xlu0 %780
  %v784 = vmul.f32 %v773, %v779
  %v785 = vmul.f32 %v775, %v781
  %v786 = vrsqrt.pop %v773
  %v787 = vmul.f32 %v773, %v786
  %vm788 = vcmp.eq.f32.partialorder %v773, inf
  %v789 = vsel %vm788, %v773, %v787
  %vm790 = vcmp.eq.f32.partialorder %v773, 0.0
  %v791 = vand.u32 %v773, 2147483648
  %v792 = vsel %vm790, %v791, %v789
  %v793 = vrsqrt.pop %v775
  %v794 = vmul.f32 %v775, %v793
  %vm795 = vcmp.eq.f32.partialorder %v775, inf
  %v796 = vsel %vm795, %v775, %v794
  %vm797 = vcmp.eq.f32.partialorder %v775, 0.0
  %v798 = vand.u32 %v775, 2147483648
  %v799 = vsel %vm797, %v798, %v796
  %v800 = vld [vmem:[%s2] sm:$0x3]
  %v802 = vrot.slane %v800, 1
  %803 = vrot.lane.b32.xlu0 %v800, 8
  %v804 = vpop.permute.xlu0 %803
  %805 = vrot.lane.b32.xlu0 %v802, 8
  %v806 = vpop.permute.xlu0 %805
  %v809 = vmul.f32 %v792, %v804
  %v810 = vmul.f32 %v799, %v806
  %v811 = vadd.f32 %v784, %v809
  %v812 = vadd.f32 %v785, %v810
  %v815 = vrot.slane %v812, 7
  %vm816 = vcmask 1041409
  %v817 = vsel %vm816, %v815, %v811
  %818 = vrot.lane.b32.xlu0 %v817, 120
  %v819 = vpop.permute.xlu0 %818
  %v823 = vrot.slane %v785, 7
  %v824 = vsel %vm816, %v823, %v784
  %v828 = vsel %vm816, %v775, %v773
  %829 = vrot.lane.b32.xlu0 %v828, 8
  %v830 = vpop.permute.xlu0 %829
  %v832 = vsel %vm757, %v819, %v824
  %v833 = vsel %vm39, %v832, %v830
  %vm834 = vcmask 189440
  %835 = vst.msk [vmem:[%s6] sm:$0x3] %vm834, %v833
  %v836 = vld [vmem:[%s3 + $0x20] sm:$0xf]
  %v837 = vpack.c.bf16 %v811, %v811
  %v838 = vpack.c.bf16 %v812, %v812
  %v841 = vunpack.c.l.b16 %v837
  %v842 = vunpack.c.l.b16 %v838
  %v843 = vrot.slane %v842, 7
  %v844 = vsel %vm816, %v843, %v841
  %v845 = vpack.c.b16 %v844, %v844
  %846 = vrot.lane.b32.xlu0 %v845, 120
  %v847 = vpop.permute.xlu0 %846
  %v849 = vsel %vm757, %v847, 0
  %vm851 = vcmask 1043456
  %v853 = vsel %vm851, %v836, 0
  %855 = vmatprep.subr.bf16.mxu0 0
  %856 = vmatpush1.bf16.msra.mxu0 0
  %857 = vmatprep.subr.bf16.mxu0 0
  %858 = vmatpush1.bf16.msra.mxu0 0
  %859 = vmatprep.subr.bf16.mxu0 0
  %860 = vmatpush1.bf16.msra.mxu0 0
  %861 = vmatprep.subr.bf16.mxu0 0
  %862 = vmatpush1.bf16.msra.mxu0 0
  %863 = vmatprep.subr.bf16.mxu0 0
  %864 = vmatpush1.bf16.msra.mxu0 0
  %865 = vmatprep.subr.bf16.mxu0 0
  %866 = vmatpush1.bf16.msra.mxu0 0
  %867 = vmatprep.subr.bf16.mxu0 0
  %868 = vmatpush1.bf16.msra.mxu0 0
  %869 = vmatprep.subr.bf16.mxu0 0
  %870 = vmatpush1.bf16.msra.mxu0 %v853
  %871 = vmatprep.subr.bf16.mxu0 0
  %872 = vmatpush2.bf16.msra.mxu0 0
  %873 = vmatprep.subr.bf16.mxu0 0
  %874 = vmatpush2.bf16.msra.mxu0 0
  %875 = vmatprep.subr.bf16.mxu0 0
  %876 = vmatpush2.bf16.msra.mxu0 0
  %877 = vmatprep.subr.bf16.mxu0 0
  %878 = vmatpush2.bf16.msra.mxu0 0
  %879 = vmatprep.subr.bf16.mxu0 0
  %880 = vmatpush2.bf16.msra.mxu0 0
  %881 = vmatprep.subr.bf16.mxu0 0
  %882 = vmatpush2.bf16.msra.mxu0 0
  %883 = vmatprep.subr.bf16.mxu0 0
  %884 = vmatpush2.bf16.msra.mxu0 0
  %885 = vmatprep.subr.bf16.mxu0 0
  %886 = vmatpush2.bf16.msra.mxu0 0
  %887 = vmatprep.mubr.bf16.mxu0 0
  %888 = vmatmul.mubr.bf16.gmra.mxu0 %v849
  %v889 = vpop.f32.mrf.mxu0
  %v890 = vadd.f32 0.0, %v889
  %v891 = vpop.f32.mrf.mxu0
  %v892 = vpop.f32.mrf.mxu0
  %v893 = vpop.f32.mrf.mxu0
  %894 = vdwg.mxu0
  %v895 = vlaneseq
  %v896 = vshrl.u32 %v895, 7
  %v897 = vsub.s32 0, %v896
  %v898 = vrot.slane %v890, %v897
  %v899 = vlaneseq
  %v900 = vshrl.u32 %v899, 7
  %v901 = vsub.s32 1, %v900
  %v902 = vrot.slane %v890, %v901
  %v903 = vsel %vm851, %v898, %v902
  %v904 = vld [vmem:[%s1] sm:$0xff]
  %v905 = vld [vmem:[%s3 + $0x18] sm:$0xf]
  %v906 = vld [vmem:[%s3 + $0x1c] sm:$0x3]
  %v907 = vpack.c.bf16 %v904, %v904
  %v910 = vunpack.c.l.b16 %v905
  %v911 = vunpack.c.l.b16 %v906
  %v912 = vpack.c.b16 %v911, %v910
  %vm913 = vcmask 89088
  %v915 = vsel %vm913, %v907, 0
  %vm917 = vcmask 1044480
  %vm918 = vcmask 1045504
  %v919 = vsel %vm917, 4294967295, 65535
  %v920 = vsel %vm918, %v919, 0
  %v922 = vand.u32 %v912, %v920
  %924 = vmatprep.subr.bf16.mxu0 0
  %925 = vmatpush1.bf16.msra.mxu0 0
  %926 = vmatprep.subr.bf16.mxu0 0
  %927 = vmatpush1.bf16.msra.mxu0 0
  %928 = vmatprep.subr.bf16.mxu0 0
  %929 = vmatpush1.bf16.msra.mxu0 0
  %930 = vmatprep.subr.bf16.mxu0 0
  %931 = vmatpush1.bf16.msra.mxu0 0
  %932 = vmatprep.subr.bf16.mxu0 0
  %933 = vmatpush1.bf16.msra.mxu0 0
  %934 = vmatprep.subr.bf16.mxu0 0
  %935 = vmatpush1.bf16.msra.mxu0 0
  %936 = vmatprep.subr.bf16.mxu0 0
  %937 = vmatpush1.bf16.msra.mxu0 0
  %938 = vmatprep.subr.bf16.mxu0 0
  %939 = vmatpush1.bf16.msra.mxu0 %v922
  %940 = vmatprep.subr.bf16.mxu0 0
  %941 = vmatpush2.bf16.msra.mxu0 0
  %942 = vmatprep.subr.bf16.mxu0 0
  %943 = vmatpush2.bf16.msra.mxu0 0
  %944 = vmatprep.subr.bf16.mxu0 0
  %945 = vmatpush2.bf16.msra.mxu0 0
  %946 = vmatprep.subr.bf16.mxu0 0
  %947 = vmatpush2.bf16.msra.mxu0 0
  %948 = vmatprep.subr.bf16.mxu0 0
  %949 = vmatpush2.bf16.msra.mxu0 0
  %950 = vmatprep.subr.bf16.mxu0 0
  %951 = vmatpush2.bf16.msra.mxu0 0
  %952 = vmatprep.subr.bf16.mxu0 0
  %953 = vmatpush2.bf16.msra.mxu0 0
  %954 = vmatprep.subr.bf16.mxu0 0
  %955 = vmatpush2.bf16.msra.mxu0 0
  %956 = vmatprep.mubr.bf16.mxu0 0
  %957 = vmatmul.mubr.bf16.gmra.mxu0 %v915
  %v958 = vpop.f32.mrf.mxu0
  %v959 = vadd.f32 %v903, %v958
  %v960 = vpop.f32.mrf.mxu0
  %v961 = vpop.f32.mrf.mxu0
  %v962 = vpop.f32.mrf.mxu0
  %963 = vdwg.mxu0
  %v964 = vld [vmem:[%s4 + $0x38] sm:$0x1]
  %v965 = vlaneseq
  %v966 = vshrl.u32 %v965, 7
  %v967 = vsub.s32 0, %v966
  %v968 = vrot.slane %v964, %v967
  %v969 = vadd.f32 %v959, %v968
  %v970 = vmax.f32 %v969, 0.0
  %v971 = vld [vmem:[%s3 + $0x28] sm:$0xf]
  %v972 = vld [vmem:[%s3 + $0x2c] sm:$0xf]
  %v973 = vld [vmem:[%s3 + $0x30] sm:$0xf]
  %v974 = vld [vmem:[%s3 + $0x34] sm:$0xf]
  %v975 = vpack.c.bf16 %v970, %v970
  %v976 = vld [vmem:[%s4 + $0x40] sm:$0x1]
  %v977 = vlaneseq
  %v978 = vshrl.u32 %v977, 7
  %v979 = vsub.s32 0, %v978
  %v980 = vrot.slane %v976, %v979
  %v985 = vunpack.c.l.b16 %v971
  %v986 = vunpack.c.l.b16 %v972
  %v987 = vunpack.c.l.b16 %v973
  %v988 = vunpack.c.l.b16 %v974
  %v989 = vpack.c.b16 %v986, %v985
  %v990 = vpack.c.b16 %v988, %v987
  %v994 = vsel %vm108, %v975, 0
  %996 = vmatprep.subr.bf16.mxu0 0
  %997 = vmatpush1.bf16.msra.mxu0 0
  %998 = vmatprep.subr.bf16.mxu0 0
  %999 = vmatpush1.bf16.msra.mxu0 0
  %1000 = vmatprep.subr.bf16.mxu0 0
  %1001 = vmatpush1.bf16.msra.mxu0 0
  %1002 = vmatprep.subr.bf16.mxu0 0
  %1003 = vmatpush1.bf16.msra.mxu0 0
  %1004 = vmatprep.subr.bf16.mxu0 0
  %1005 = vmatpush1.bf16.msra.mxu0 0
  %1006 = vmatprep.subr.bf16.mxu0 0
  %1007 = vmatpush1.bf16.msra.mxu0 0
  %1008 = vmatprep.subr.bf16.mxu0 0
  %1009 = vmatpush1.bf16.msra.mxu0 %v990
  %1010 = vmatprep.subr.bf16.mxu0 0
  %1011 = vmatpush1.bf16.msra.mxu0 %v989
  %1012 = vmatprep.subr.bf16.mxu0 0
  %1013 = vmatpush2.bf16.msra.mxu0 0
  %1014 = vmatprep.subr.bf16.mxu0 0
  %1015 = vmatpush2.bf16.msra.mxu0 0
  %1016 = vmatprep.subr.bf16.mxu0 0
  %1017 = vmatpush2.bf16.msra.mxu0 0
  %1018 = vmatprep.subr.bf16.mxu0 0
  %1019 = vmatpush2.bf16.msra.mxu0 0
  %1020 = vmatprep.subr.bf16.mxu0 0
  %1021 = vmatpush2.bf16.msra.mxu0 0
  %1022 = vmatprep.subr.bf16.mxu0 0
  %1023 = vmatpush2.bf16.msra.mxu0 0
  %1024 = vmatprep.subr.bf16.mxu0 0
  %1025 = vmatpush2.bf16.msra.mxu0 0
  %1026 = vmatprep.subr.bf16.mxu0 0
  %1027 = vmatpush2.bf16.msra.mxu0 0
  %1028 = vmatprep.mubr.bf16.mxu0 0
  %1029 = vmatmul.mubr.bf16.gmra.mxu0 %v994
  %v1030 = vpop.f32.mrf.mxu0
  %v1031 = vadd.f32 %v980, %v1030
  %v1032 = vpop.f32.mrf.mxu0
  %v1033 = vpop.f32.mrf.mxu0
  %v1034 = vpop.f32.mrf.mxu0
  %1035 = vdwg.mxu0
  %v1036 = vmax.f32 %v1031, 0.0
  %v1037 = vld [vmem:[%s3 + $0x38] sm:$0xf]
  %v1038 = vld [vmem:[%s3 + $0x3c] sm:$0xf]
  %v1039 = vld [vmem:[%s3 + $0x40] sm:$0xf]
  %v1040 = vld [vmem:[%s3 + $0x44] sm:$0xf]
  %v1041 = vpack.c.bf16 %v1036, %v1036
  %v1042 = vld [vmem:[%s4 + $0x48] sm:$0x1]
  %v1043 = vlaneseq
  %v1044 = vshrl.u32 %v1043, 7
  %v1045 = vsub.s32 0, %v1044
  %v1046 = vrot.slane %v1042, %v1045
  %v1051 = vunpack.c.l.b16 %v1037
  %v1052 = vunpack.c.l.b16 %v1038
  %v1053 = vunpack.c.l.b16 %v1039
  %v1054 = vunpack.c.l.b16 %v1040
  %v1055 = vpack.c.b16 %v1052, %v1051
  %v1056 = vpack.c.b16 %v1054, %v1053
  %v1060 = vsel %vm108, %v1041, 0
  %1062 = vmatprep.subr.bf16.mxu0 0
  %1063 = vmatpush1.bf16.msra.mxu0 0
  %1064 = vmatprep.subr.bf16.mxu0 0
  %1065 = vmatpush1.bf16.msra.mxu0 0
  %1066 = vmatprep.subr.bf16.mxu0 0
  %1067 = vmatpush1.bf16.msra.mxu0 0
  %1068 = vmatprep.subr.bf16.mxu0 0
  %1069 = vmatpush1.bf16.msra.mxu0 0
  %1070 = vmatprep.subr.bf16.mxu0 0
  %1071 = vmatpush1.bf16.msra.mxu0 0
  %1072 = vmatprep.subr.bf16.mxu0 0
  %1073 = vmatpush1.bf16.msra.mxu0 0
  %1074 = vmatprep.subr.bf16.mxu0 0
  %1075 = vmatpush1.bf16.msra.mxu0 %v1056
  %1076 = vmatprep.subr.bf16.mxu0 0
  %1077 = vmatpush1.bf16.msra.mxu0 %v1055
  %1078 = vmatprep.subr.bf16.mxu0 0
  %1079 = vmatpush2.bf16.msra.mxu0 0
  %1080 = vmatprep.subr.bf16.mxu0 0
  %1081 = vmatpush2.bf16.msra.mxu0 0
  %1082 = vmatprep.subr.bf16.mxu0 0
  %1083 = vmatpush2.bf16.msra.mxu0 0
  %1084 = vmatprep.subr.bf16.mxu0 0
  %1085 = vmatpush2.bf16.msra.mxu0 0
  %1086 = vmatprep.subr.bf16.mxu0 0
  %1087 = vmatpush2.bf16.msra.mxu0 0
  %1088 = vmatprep.subr.bf16.mxu0 0
  %1089 = vmatpush2.bf16.msra.mxu0 0
  %1090 = vmatprep.subr.bf16.mxu0 0
  %1091 = vmatpush2.bf16.msra.mxu0 0
  %1092 = vmatprep.subr.bf16.mxu0 0
  %1093 = vmatpush2.bf16.msra.mxu0 0
  %1094 = vmatprep.mubr.bf16.mxu0 0
  %1095 = vmatmul.mubr.bf16.gmra.mxu0 %v1060
  %v1096 = vpop.f32.mrf.mxu0
  %v1097 = vadd.f32 %v1046, %v1096
  %v1098 = vpop.f32.mrf.mxu0
  %v1099 = vpop.f32.mrf.mxu0
  %v1100 = vpop.f32.mrf.mxu0
  %1101 = vdwg.mxu0
  %v1102 = vmax.f32 %v1097, -20.0
  %v1103 = vmin.f32 %v1102, 2.0
  %v1104 = vmul.f32 %v1103, 1.442695
  %v1105 = vpow.pop %v1104
  %vm1106 = vcmask 31744
  %v1107 = vsel %vm1106, %v1097, %v1105
  %1108 = vst.msk [vmem:[%s5] sm:$0xff] %vm757, %v1107
  // Predicated region
  $region22: #{pearl_agent_forward.1} parent=0 // pred_check
    _
  $region23: #{pearl_agent_forward.1} parent=0 // pred_check_branch
    %1110 = sbr.rel (0) target = $region25
  $region24: #{pearl_agent_forward.1} parent=0 // pred_region
    _
  $region25: #{pearl_agent_forward.1} parent=0 // pred_fallthru
    _
  // Predicated region
  $region26: #{pearl_agent_forward.1} parent=0 // pred_check
    _
  $region27: #{pearl_agent_forward.1} parent=0 // pred_check_branch
    %1112 = sbr.rel (0) target = $region29
  $region28: #{pearl_agent_forward.1} parent=0 // pred_region
    _
  $region29: #{pearl_agent_forward.1} parent=0 // pred_fallthru
    _
  // Predicated region
  $region30: #{pearl_agent_forward.1} parent=0 // pred_check
    _
  $region31: #{pearl_agent_forward.1} parent=0 // pred_check_branch
    %1114 = sbr.rel (0) target = $region33
  $region32: #{pearl_agent_forward.1} parent=0 // pred_region
    _
  $region33: #{pearl_agent_forward.1} parent=0 // pred_fallthru
    _
  // Predicated region
  $region34: #{pearl_agent_forward.1} parent=0 // pred_check
    _
  $region35: #{pearl_agent_forward.1} parent=0 // pred_check_branch
    %1116 = sbr.rel (0) target = $region37
  $region36: #{pearl_agent_forward.1} parent=0 // pred_region
    _
  $region37: #{pearl_agent_forward.1} parent=0 // pred_fallthru
    _

</llo_original>
